<compile_context>
chip_gen: v7x
topology: tpu7x:2x2x1
jax: 0.10.0
libtpu: 0.0.40
codegen_flags: <defaults>
</compile_context>

<pallas_src>
import jax
import jax.numpy as jnp
from jax.experimental import pallas as pl
from jax.experimental.pallas import tpu as pltpu


def layer_epilogue_kernel(x_ref, noise_ref, nw_ref, ys1_ref, yb_ref, o_ref):
    # x_ref:     (1, Ct, HW)  channel-tile of this batch element's feature map
    # noise_ref: (1, 1, HW)   per-pixel noise (constant over channels)
    # nw_ref:    (Ct, 1)      per-channel noise weight
    # ys1_ref:   (1, Ct, 1)   precomputed style scale + 1
    # yb_ref:    (1, Ct, 1)   precomputed style shift
    x = x_ref[0].astype(jnp.float32)          # (Ct, HW)
    noise = noise_ref[0].astype(jnp.float32)  # (1, HW)
    nw = nw_ref[...].astype(jnp.float32)      # (Ct, 1)

    # NoiseLayer: per-pixel noise with per-channel weight.
    x = x + nw * noise                        # broadcast -> (Ct, HW)

    # LeakyReLU(0.2)  (max(x, 0.2x) == leaky_relu for slope < 1)
    x = jnp.maximum(x, 0.2 * x)

    # InstanceNorm2d (affine=False, eps=1e-5); stats over the spatial (lane)
    # axis.  Two-pass centered variance for numerical robustness.
    mean = jnp.mean(x, axis=-1, keepdims=True)        # (Ct, 1)
    xc = x - mean
    var = jnp.mean(xc * xc, axis=-1, keepdims=True)   # biased variance

    # Fuse inv_std with the style scale into one per-channel scalar, then a
    # single fused scale-and-shift pass over the tile.
    s = jax.lax.rsqrt(var + 1e-5) * ys1_ref[0].astype(jnp.float32)   # (Ct, 1)
    b = yb_ref[0].astype(jnp.float32)                                # (Ct, 1)
    o_ref[0] = (xc * s + b).astype(o_ref.dtype)


def _choose_channel_tile(C, HW, in_itemsize, out_itemsize,
                         vmem_budget_bytes=20 * 1024 * 1024):
    """Largest channel tile whose double-buffered in+out stays in budget."""
    per_c = 2 * HW * in_itemsize + 2 * HW * out_itemsize
    ct = int(vmem_budget_bytes // max(per_c, 1))
    if ct >= C:
        return C
    # channel tiles map to sublanes -> keep Ct a multiple of 8
    return min(C, max(8, (ct // 8) * 8))


def layer_epilogue(x_nchw, noise_nchw, noise_weight, dlatents, style_w, style_b):
    N, C, H, W = x_nchw.shape
    HW = H * W
    out_dtype = x_nchw.dtype

    # --- StyleMod hoisted to XLA: one batched GEMM for the whole batch. ---
    style = (dlatents.astype(jnp.float32) @ style_w.astype(jnp.float32).T
             + style_b.astype(jnp.float32))                    # (N, 2C)
    ys1 = (style[:, :C] + 1.0).reshape(N, C, 1)                # scale + 1
    yb = style[:, C:].reshape(N, C, 1)                         # shift

    x3 = x_nchw.reshape(N, C, HW)
    n3 = noise_nchw.reshape(N, 1, HW)
    nw = noise_weight.reshape(C, 1).astype(jnp.float32)

    ct = _choose_channel_tile(C, HW, x3.dtype.itemsize,
                              jnp.dtype(out_dtype).itemsize)
    nct = pl.cdiv(C, ct)

    out = pl.pallas_call(
        layer_epilogue_kernel,
        out_shape=jax.ShapeDtypeStruct((N, C, HW), out_dtype),
        grid_spec=pltpu.PrefetchScalarGridSpec(
            num_scalar_prefetch=0,
            grid=(N, nct),
            in_specs=[
                pl.BlockSpec((1, ct, HW), lambda n, c: (n, c, 0)),  # x
                pl.BlockSpec((1, 1, HW), lambda n, c: (n, 0, 0)),   # noise
                pl.BlockSpec((ct, 1), lambda n, c: (c, 0)),         # noise w
                pl.BlockSpec((1, ct, 1), lambda n, c: (n, c, 0)),   # ys + 1
                pl.BlockSpec((1, ct, 1), lambda n, c: (n, c, 0)),   # yb
            ],
            out_specs=pl.BlockSpec((1, ct, HW), lambda n, c: (n, c, 0)),
        ),
        compiler_params=pltpu.CompilerParams(
            dimension_semantics=("parallel", "parallel"),
            vmem_limit_bytes=48 * 1024 * 1024,
        ),
    )(x3, n3, nw, ys1, yb)
    return out.reshape(N, C, H, W)


def layer_epilogue_reference(x, noise, noise_weight, dlatents, style_w, style_b):
    """Pure-JAX reference mirroring the PyTorch forward (NCHW)."""
    N, C, H, W = x.shape
    y = x + noise_weight.reshape(1, C, 1, 1) * noise
    y = jnp.where(y >= 0.0, y, 0.2 * y)
    m = jnp.mean(y, axis=(2, 3), keepdims=True)
    v = jnp.mean((y - m) ** 2, axis=(2, 3), keepdims=True)
    y = (y - m) / jnp.sqrt(v + 1e-5)
    style = dlatents @ style_w.T + style_b              # (N, 2C)
    ys = style[:, :C].reshape(N, C, 1, 1)
    yb = style[:, C:].reshape(N, C, 1, 1)
    return y * (ys + 1.0) + yb


if __name__ == "__main__":
    N, C, H, W = 2, 4, 16, 16
    D = 32  # dlatent_size

    key = jax.random.PRNGKey(0)
    k_x, k_noise, k_nw, k_dl, k_sw = jax.random.split(key, 5)

    x = jax.random.normal(k_x, (N, C, H, W), dtype=jnp.float32)
    noise = jax.random.normal(k_noise, (N, 1, H, W), dtype=jnp.float32)
    dlatents = jax.random.normal(k_dl, (N, D), dtype=jnp.float32)

    # NoiseLayer weight (PyTorch inits to zeros; use nonzero values so the
    # noise path is exercised -- semantics identical).
    noise_weight = 0.1 * jax.random.normal(k_nw, (C,), dtype=jnp.float32)

    # StyleMod linear: MyLinear(D, 2C, gain=1.0, use_wscale=True)
    #   init_std = 1.0, w_mul = gain / sqrt(D); fold w_mul into the weight.
    w_mul = 1.0 / jnp.sqrt(jnp.float32(D))
    style_w = jax.random.normal(k_sw, (2 * C, D), dtype=jnp.float32) * w_mul
    style_b = jnp.zeros((2 * C,), dtype=jnp.float32)   # b_mul = 1

    out = layer_epilogue(x, noise, noise_weight, dlatents, style_w, style_b)
    out = jax.block_until_ready(out)

    ref = layer_epilogue_reference(x, noise, noise_weight, dlatents,
                                   style_w, style_b)
    assert out.shape == (N, C, H, W)
    assert jnp.allclose(out, ref, atol=1e-4, rtol=1e-4), "mismatch vs reference"

    print("KERNEL_OK")
</pallas_src>

<mosaic_0001>
module attributes {stable_mosaic.version = 11 : i64} {
  func.func @layer_epilogue_kernel(%arg0: i32, %arg1: i32, %arg2: memref<1x4x256xf32, #tpu.memory_space<vmem>>, %arg3: memref<1x1x256xf32, #tpu.memory_space<vmem>>, %arg4: memref<4x1xf32, #tpu.memory_space<vmem>>, %arg5: memref<1x4x1xf32, #tpu.memory_space<vmem>>, %arg6: memref<1x4x1xf32, #tpu.memory_space<vmem>>, %arg7: memref<1x4x256xf32, #tpu.memory_space<vmem>>) attributes {dimension_semantics = [#tpu.dimension_semantics<parallel>, #tpu.dimension_semantics<parallel>], iteration_bounds = array<i64: 2, 1>, scalar_prefetch = 0 : i64, scratch_operands = 0 : i64, tpu.core_type = #tpu.core_type<tc>, window_params = [{transform_indices = @transform_0, window_bounds = array<i64: 1, 4, 256>}, {transform_indices = @transform_1, window_bounds = array<i64: 1, 1, 256>}, {transform_indices = @transform_2, window_bounds = array<i64: 4, 1>}, {transform_indices = @transform_3, window_bounds = array<i64: 1, 4, 1>}, {transform_indices = @transform_4, window_bounds = array<i64: 1, 4, 1>}, {transform_indices = @transform_5, window_bounds = array<i64: 1, 4, 256>}]} {
    %c0 = arith.constant 0 : index
    %c0_0 = arith.constant 0 : index
    %c0_1 = arith.constant 0 : index
    %0 = vector.load %arg2[%c0, %c0_0, %c0_1] : memref<1x4x256xf32, #tpu.memory_space<vmem>>, vector<1x4x256xf32>
    %1 = vector.shape_cast %0 : vector<1x4x256xf32> to vector<4x256xf32>
    %c0_2 = arith.constant 0 : index
    %c0_3 = arith.constant 0 : index
    %c0_4 = arith.constant 0 : index
    %2 = vector.load %arg3[%c0_2, %c0_3, %c0_4] : memref<1x1x256xf32, #tpu.memory_space<vmem>>, vector<1x1x256xf32>
    %3 = vector.shape_cast %2 : vector<1x1x256xf32> to vector<1x256xf32>
    %c0_5 = arith.constant 0 : index
    %c0_6 = arith.constant 0 : index
    %4 = vector.load %arg4[%c0_5, %c0_6] : memref<4x1xf32, #tpu.memory_space<vmem>>, vector<4x1xf32>
    %5 = vector.broadcast %4 : vector<4x1xf32> to vector<4x256xf32>
    %6 = vector.broadcast %3 : vector<1x256xf32> to vector<4x256xf32>
    %7 = arith.mulf %5, %6 : vector<4x256xf32>
    %8 = arith.addf %1, %7 : vector<4x256xf32>
    %cst = arith.constant 2.000000e-01 : f32
    %9 = vector.broadcast %cst : f32 to vector<4x256xf32>
    %10 = arith.mulf %9, %8 : vector<4x256xf32>
    %11 = arith.maximumf %8, %10 : vector<4x256xf32>
    %cst_7 = arith.constant dense<0.000000e+00> : vector<4xf32>
    %12 = vector.multi_reduction <add>, %11, %cst_7 [1] : vector<4x256xf32> to vector<4xf32>
    %13 = vector.shape_cast %12 : vector<4xf32> to vector<4x1xf32>
    %cst_8 = arith.constant 2.560000e+02 : f32
    %14 = vector.broadcast %cst_8 : f32 to vector<4x1xf32>
    %15 = arith.divf %13, %14 : vector<4x1xf32>
    %16 = vector.broadcast %15 : vector<4x1xf32> to vector<4x256xf32>
    %17 = arith.subf %11, %16 : vector<4x256xf32>
    %18 = arith.mulf %17, %17 : vector<4x256xf32>
    %cst_9 = arith.constant dense<0.000000e+00> : vector<4xf32>
    %19 = vector.multi_reduction <add>, %18, %cst_9 [1] : vector<4x256xf32> to vector<4xf32>
    %20 = vector.shape_cast %19 : vector<4xf32> to vector<4x1xf32>
    %cst_10 = arith.constant 2.560000e+02 : f32
    %21 = vector.broadcast %cst_10 : f32 to vector<4x1xf32>
    %22 = arith.divf %20, %21 : vector<4x1xf32>
    %cst_11 = arith.constant 9.99999974E-6 : f32
    %23 = vector.broadcast %cst_11 : f32 to vector<4x1xf32>
    %24 = arith.addf %22, %23 : vector<4x1xf32>
    %25 = math.rsqrt %24 : vector<4x1xf32>
    %c0_12 = arith.constant 0 : index
    %c0_13 = arith.constant 0 : index
    %c0_14 = arith.constant 0 : index
    %26 = vector.load %arg5[%c0_12, %c0_13, %c0_14] : memref<1x4x1xf32, #tpu.memory_space<vmem>>, vector<1x4x1xf32>
    %27 = vector.shape_cast %26 : vector<1x4x1xf32> to vector<4x1xf32>
    %28 = arith.mulf %25, %27 : vector<4x1xf32>
    %c0_15 = arith.constant 0 : index
    %c0_16 = arith.constant 0 : index
    %c0_17 = arith.constant 0 : index
    %29 = vector.load %arg6[%c0_15, %c0_16, %c0_17] : memref<1x4x1xf32, #tpu.memory_space<vmem>>, vector<1x4x1xf32>
    %30 = vector.shape_cast %29 : vector<1x4x1xf32> to vector<4x1xf32>
    %31 = vector.broadcast %28 : vector<4x1xf32> to vector<4x256xf32>
    %32 = arith.mulf %17, %31 : vector<4x256xf32>
    %33 = vector.broadcast %30 : vector<4x1xf32> to vector<4x256xf32>
    %34 = arith.addf %32, %33 : vector<4x256xf32>
    %c0_18 = arith.constant 0 : index
    %c0_19 = arith.constant 0 : index
    %c0_20 = arith.constant 0 : index
    %35 = vector.load %arg7[%c0_18, %c0_19, %c0_20] : memref<1x4x256xf32, #tpu.memory_space<vmem>>, vector<1x4x256xf32>
    %36 = vector.shape_cast %35 : vector<1x4x256xf32> to vector<4x256xf32>
    %37 = vector.shape_cast %34 : vector<4x256xf32> to vector<1x4x256xf32>
    tpu.vector_store %arg7[%c0_18, %c0_19, %c0_20], %37 {strides = array<i32>} : memref<1x4x256xf32, #tpu.memory_space<vmem>>, vector<1x4x256xf32>,
    return
  }
  func.func @transform_0(%arg0: i32, %arg1: i32) -> (i32, i32, i32) {
    %c0_i32 = arith.constant 0 : i32
    %c0_i32_0 = arith.constant 0 : i32
    return %arg0, %arg1, %c0_i32 : i32, i32, i32
  }
  func.func @transform_1(%arg0: i32, %arg1: i32) -> (i32, i32, i32) {
    %c0_i32 = arith.constant 0 : i32
    %c0_i32_0 = arith.constant 0 : i32
    %c0_i32_1 = arith.constant 0 : i32
    return %arg0, %c0_i32, %c0_i32_0 : i32, i32, i32
  }
  func.func @transform_2(%arg0: i32, %arg1: i32) -> (i32, i32) {
    %c0_i32 = arith.constant 0 : i32
    %c0_i32_0 = arith.constant 0 : i32
    return %arg1, %c0_i32 : i32, i32
  }
  func.func @transform_3(%arg0: i32, %arg1: i32) -> (i32, i32, i32) {
    %c0_i32 = arith.constant 0 : i32
    %c0_i32_0 = arith.constant 0 : i32
    return %arg0, %arg1, %c0_i32 : i32, i32, i32
  }
  func.func @transform_4(%arg0: i32, %arg1: i32) -> (i32, i32, i32) {
    %c0_i32 = arith.constant 0 : i32
    %c0_i32_0 = arith.constant 0 : i32
    return %arg0, %arg1, %c0_i32 : i32, i32, i32
  }
  func.func @transform_5(%arg0: i32, %arg1: i32) -> (i32, i32, i32) {
    %c0_i32 = arith.constant 0 : i32
    %c0_i32_0 = arith.constant 0 : i32
    return %arg0, %arg1, %c0_i32 : i32, i32, i32
  }
}

</mosaic_0001>

<llo_original>
// kernel: tpu_custom_call.1
$region0: #{tpu_custom_call.1}
  #allocation0 [shape = 'u32[]', space=smem, size = 0x4, offset = 0x4, fixed_abs, tag = 'smem constant byte address 0x4 - core index']
  #allocation1 [shape = 'u32[144,128]{1,0:T(1,128)}', space=vmem, size = 0x12000, scoped, tag = 'internal scratch']
  %s0 = inlined_call_operand.vmem [shape: f32[2,4,256], index: 0, kind: input, shape index: {}]
  %s1 = inlined_call_operand.vmem [shape: f32[2,1,256], index: 1, kind: input, shape index: {}]
  %s2 = inlined_call_operand.vmem [shape: f32[4,1], index: 2, kind: input, shape index: {}]
  %s3 = inlined_call_operand.vmem [shape: f32[2,4,1], index: 3, kind: input, shape index: {}]
  %s4 = inlined_call_operand.vmem [shape: f32[2,4,1], index: 4, kind: input, shape index: {}]
  %s5 = inlined_call_operand.hbm [shape: f32[2,4,256], index: 5, kind: output, shape index: {}]
  %s6 = sld [smem:[#allocation0]]
  $region53: #{tpu_custom_call.1} parent=0
    _
  %s8 = ssub.s32 1, %s6
  %s9 = scalar_select 0, %s8, %s6
  $region1: #{tpu_custom_call.1} parent=0
    #allocation2 [shape = 'u8[8192]{0}', space=vmem, size = 0x2000, scoped, tag = 'output window, operand 0']
    #allocation3 [shape = 's32[2]{0}', space=sflag, size = 0x8, scoped, tag = 'scoped memory for tpu_custom_call.1']
    %10 = vsyncpa [#allocation3], 0
    %s11 = scalar_lea.sflag [#allocation3], 1
    %12 = vsyncpa %s11, 0
    loop: start=0, step=1, limit=4
    $region2: #{tpu_custom_call.1} parent=1 // loop_pre_header
      _
    $region3: #{tpu_custom_call.1} parent=1 // loop_header
      %s14 = sphi 0, %s18
      %p15 = scmp.ge.s32.totalorder %s14, 4
      %s21 = sphi 0, %s33
      %s22 = sphi 0, %s29
      %s23 = sphi 0, %s21
      %s24 = sphi 0, %s22
      %s25 = sphi 0, %s23
      %s26 = sphi 0, %s24
      %s38 = sphi 0, %s40
      %s41 = sphi 0, %s38
      %s42 = sphi 0, %s41
      %s58 = sphi 0, %s42
      %s64 = sphi 0, %s66
      %s67 = sphi 0, %s64
      %s68 = sphi 0, %s67
      %s84 = sphi 0, %s68
      %s90 = sphi 0, %s92
      %s93 = sphi 0, %s90
      %s94 = sphi 0, %s93
      %s110 = sphi 0, %s94
      %s118 = sphi 0, %s120
      %s121 = sphi 0, %s118
      %s122 = sphi 0, %s121
      %s138 = sphi 0, %s122
      %s146 = sphi 0, %s148
      %s149 = sphi 0, %s146
      %s150 = sphi 0, %s149
      %s166 = sphi 0, %s150
      %s174 = sphi 0, %s176
      %s177 = sphi 0, %s174
      %s178 = sphi 0, %s177
      %s194 = sphi 0, %s178
    $region4: #{tpu_custom_call.1} parent=1 // loop_header_branch
      %17 = sbr.rel (%p15) target = $region8
    $region5: #{tpu_custom_call.1} parent=1 // loop_body
      %s19 = ssub.s32 %s14, 1
      %s20 = ssub.s32 %s14, 2
      %s27 = sadd.s32 1, %s22
      %p28 = scmp.ge.s32.totalorder %s27, 1
      %s29 = scalar_select %p28, 0, %s27
      %s30 = sadd.s32 1, %s21
      %s31 = scalar_select %p28, %s30, %s21
      %p32 = scmp.ge.s32.totalorder %s31, 2
      %s33 = scalar_select %p32, 0, %s31
      %s34 = ssub.s32 %s21, %s33
      %s35 = ssub.s32 %s22, %s29
      %s36 = sor.u32 %s34, %s35
      %p37 = scmp.eq.s32.totalorder %s36, 0
      %s39 = sadd.s32 %s38, 1
      %s40 = scalar_select %p37, %s38, %s39
      %p43 = pneg %p37
      %p44 = scmp.eq.s32.totalorder %s14, 1
      %p45 = por %p43, %p44
      %p46 = scmp.ne.s32.totalorder %s38, %s41
      %p47 = scmp.eq.s32.totalorder %s14, 0
      %p48 = por %p46, %p47
      %p49 = scmp.ne.s32.totalorder %s38, %s41
      %p50 = scmp.eq.s32.totalorder %s19, 1
      %p51 = por %p49, %p50
      %p52 = scmp.ne.s32.totalorder %s41, %s42
      %p53 = scmp.eq.s32.totalorder %s19, 0
      %p54 = por %p52, %p53
      %p55 = scmp.ne.s32.totalorder %s41, %s42
      %p56 = scmp.eq.s32.totalorder %s20, 1
      %p57 = por %p55, %p56
      %p59 = scmp.ne.s32.totalorder %s42, %s58
      %p60 = scmp.eq.s32.totalorder %s20, 0
      %p61 = por %p59, %p60
      %s62 = ssub.s32 %s21, %s33
      %p63 = scmp.eq.s32.totalorder %s62, 0
      %s65 = sadd.s32 %s64, 1
      %s66 = scalar_select %p63, %s64, %s65
      %p69 = pneg %p63
      %p70 = scmp.eq.s32.totalorder %s14, 1
      %p71 = por %p69, %p70
      %p72 = scmp.ne.s32.totalorder %s64, %s67
      %p73 = scmp.eq.s32.totalorder %s14, 0
      %p74 = por %p72, %p73
      %p75 = scmp.ne.s32.totalorder %s64, %s67
      %p76 = scmp.eq.s32.totalorder %s19, 1
      %p77 = por %p75, %p76
      %p78 = scmp.ne.s32.totalorder %s67, %s68
      %p79 = scmp.eq.s32.totalorder %s19, 0
      %p80 = por %p78, %p79
      %p81 = scmp.ne.s32.totalorder %s67, %s68
      %p82 = scmp.eq.s32.totalorder %s20, 1
      %p83 = por %p81, %p82
      %p85 = scmp.ne.s32.totalorder %s68, %s84
      %p86 = scmp.eq.s32.totalorder %s20, 0
      %p87 = por %p85, %p86
      %s88 = ssub.s32 %s22, %s29
      %p89 = scmp.eq.s32.totalorder %s88, 0
      %s91 = sadd.s32 %s90, 1
      %s92 = scalar_select %p89, %s90, %s91
      %p95 = pneg %p89
      %p96 = scmp.eq.s32.totalorder %s14, 1
      %p97 = por %p95, %p96
      %p98 = scmp.ne.s32.totalorder %s90, %s93
      %p99 = scmp.eq.s32.totalorder %s14, 0
      %p100 = por %p98, %p99
      %p101 = scmp.ne.s32.totalorder %s90, %s93
      %p102 = scmp.eq.s32.totalorder %s19, 1
      %p103 = por %p101, %p102
      %p104 = scmp.ne.s32.totalorder %s93, %s94
      %p105 = scmp.eq.s32.totalorder %s19, 0
      %p106 = por %p104, %p105
      %p107 = scmp.ne.s32.totalorder %s93, %s94
      %p108 = scmp.eq.s32.totalorder %s20, 1
      %p109 = por %p107, %p108
      %p111 = scmp.ne.s32.totalorder %s94, %s110
      %p112 = scmp.eq.s32.totalorder %s20, 0
      %p113 = por %p111, %p112
      %s114 = ssub.s32 %s21, %s33
      %s115 = ssub.s32 %s22, %s29
      %s116 = sor.u32 %s114, %s115
      %p117 = scmp.eq.s32.totalorder %s116, 0
      %s119 = sadd.s32 %s118, 1
      %s120 = scalar_select %p117, %s118, %s119
      %p123 = pneg %p117
      %p124 = scmp.eq.s32.totalorder %s14, 1
      %p125 = por %p123, %p124
      %p126 = scmp.ne.s32.totalorder %s118, %s121
      %p127 = scmp.eq.s32.totalorder %s14, 0
      %p128 = por %p126, %p127
      %p129 = scmp.ne.s32.totalorder %s118, %s121
      %p130 = scmp.eq.s32.totalorder %s19, 1
      %p131 = por %p129, %p130
      %p132 = scmp.ne.s32.totalorder %s121, %s122
      %p133 = scmp.eq.s32.totalorder %s19, 0
      %p134 = por %p132, %p133
      %p135 = scmp.ne.s32.totalorder %s121, %s122
      %p136 = scmp.eq.s32.totalorder %s20, 1
      %p137 = por %p135, %p136
      %p139 = scmp.ne.s32.totalorder %s122, %s138
      %p140 = scmp.eq.s32.totalorder %s20, 0
      %p141 = por %p139, %p140
      %s142 = ssub.s32 %s21, %s33
      %s143 = ssub.s32 %s22, %s29
      %s144 = sor.u32 %s142, %s143
      %p145 = scmp.eq.s32.totalorder %s144, 0
      %s147 = sadd.s32 %s146, 1
      %s148 = scalar_select %p145, %s146, %s147
      %p151 = pneg %p145
      %p152 = scmp.eq.s32.totalorder %s14, 1
      %p153 = por %p151, %p152
      %p154 = scmp.ne.s32.totalorder %s146, %s149
      %p155 = scmp.eq.s32.totalorder %s14, 0
      %p156 = por %p154, %p155
      %p157 = scmp.ne.s32.totalorder %s146, %s149
      %p158 = scmp.eq.s32.totalorder %s19, 1
      %p159 = por %p157, %p158
      %p160 = scmp.ne.s32.totalorder %s149, %s150
      %p161 = scmp.eq.s32.totalorder %s19, 0
      %p162 = por %p160, %p161
      %p163 = scmp.ne.s32.totalorder %s149, %s150
      %p164 = scmp.eq.s32.totalorder %s20, 1
      %p165 = por %p163, %p164
      %p167 = scmp.ne.s32.totalorder %s150, %s166
      %p168 = scmp.eq.s32.totalorder %s20, 0
      %p169 = por %p167, %p168
      %s170 = ssub.s32 %s21, %s33
      %s171 = ssub.s32 %s22, %s29
      %s172 = sor.u32 %s170, %s171
      %p173 = scmp.eq.s32.totalorder %s172, 0
      %s175 = sadd.s32 %s174, 1
      %s176 = scalar_select %p173, %s174, %s175
      %p179 = pneg %p173
      %p180 = scmp.eq.s32.totalorder %s14, 1
      %p181 = por %p179, %p180
      %p182 = scmp.ne.s32.totalorder %s174, %s177
      %p183 = scmp.eq.s32.totalorder %s14, 0
      %p184 = por %p182, %p183
      %p185 = scmp.ne.s32.totalorder %s174, %s177
      %p186 = scmp.eq.s32.totalorder %s19, 1
      %p187 = por %p185, %p186
      %p188 = scmp.ne.s32.totalorder %s177, %s178
      %p189 = scmp.eq.s32.totalorder %s19, 0
      %p190 = por %p188, %p189
      %p191 = scmp.ne.s32.totalorder %s177, %s178
      %p192 = scmp.eq.s32.totalorder %s20, 1
      %p193 = por %p191, %p192
      %p195 = scmp.ne.s32.totalorder %s178, %s194
      %p196 = scmp.eq.s32.totalorder %s20, 0
      %p197 = por %p195, %p196
      %p198 = scmp.le.s32.totalorder 1, %s14
      %p199 = scmp.lt.s32.totalorder %s14, 3
      %p200 = pnand %p198, %p199
      %p201 = pneg %p200
      // Predicated region
      $region9: #{tpu_custom_call.1} parent=5 // pred_check
        _
      $region10: #{tpu_custom_call.1} parent=5 // pred_check_branch
        %203 = sbr.rel (%p200) target = $region12
      $region11: #{tpu_custom_call.1} parent=5 // pred_region
        %s204 = ssub.s32 %s14, 1
        // Predicated region
        $region13: #{tpu_custom_call.1} parent=11 // pred_check
          %p205 = pneg %p106
        $region14: #{tpu_custom_call.1} parent=11 // pred_check_branch
          %207 = sbr.rel (%p205) target = $region16
        $region15: #{tpu_custom_call.1} parent=11 // pred_region
          %p208 = scmp.lt.s32.totalorder %s24, 0
          %s209 = scalar_select %p208, %s24, 0
          %s210 = smul.addr %s209, 4
          %s211 = scalar_lea.vmem %s2, %s210
        $region16: #{tpu_custom_call.1} parent=11 // pred_fallthru
          _
      $region12: #{tpu_custom_call.1} parent=5 // pred_fallthru
        _
      %p212 = scmp.lt.s32.totalorder %s14, 2
      // Predicated region
      $region17: #{tpu_custom_call.1} parent=5 // pred_check
        %p213 = pneg %p212
      $region18: #{tpu_custom_call.1} parent=5 // pred_check_branch
        %215 = sbr.rel (%p213) target = $region20
      $region19: #{tpu_custom_call.1} parent=5 // pred_region
        // Predicated region
        $region21: #{tpu_custom_call.1} parent=19 // pred_check
          %p216 = pneg %p48
        $region22: #{tpu_custom_call.1} parent=19 // pred_check_branch
          %218 = sbr.rel (%p216) target = $region24
        $region23: #{tpu_custom_call.1} parent=19 // pred_region
          %p219 = scmp.lt.s32.totalorder %s21, 1
          %s220 = scalar_select %p219, %s21, 1
          %p221 = scmp.lt.s32.totalorder %s22, 0
          %s222 = scalar_select %p221, %s22, 0
          %s223 = smul.addr %s222, 2
          %s224 = smul.addr %s220, 2
          %s225 = sadd.s32 %s223, %s224
          %s226 = smul.addr %s225, 4
          %s227 = scalar_lea.vmem %s0, %s226
        $region24: #{tpu_custom_call.1} parent=19 // pred_fallthru
          _
        // Predicated region
        $region25: #{tpu_custom_call.1} parent=19 // pred_check
          %p228 = pneg %p74
        $region26: #{tpu_custom_call.1} parent=19 // pred_check_branch
          %230 = sbr.rel (%p228) target = $region28
        $region27: #{tpu_custom_call.1} parent=19 // pred_region
          %p231 = scmp.lt.s32.totalorder %s21, 1
          %s232 = scalar_select %p231, %s21, 1
          %s233 = smul.addr %s232, 2
          %s234 = scalar_lea.vmem %s1, %s233
        $region28: #{tpu_custom_call.1} parent=19 // pred_fallthru
          _
        // Predicated region
        $region29: #{tpu_custom_call.1} parent=19 // pred_check
          %p235 = pneg %p128
        $region30: #{tpu_custom_call.1} parent=19 // pred_check_branch
          %237 = sbr.rel (%p235) target = $region32
        $region31: #{tpu_custom_call.1} parent=19 // pred_region
          %p238 = scmp.lt.s32.totalorder %s21, 1
          %s239 = scalar_select %p238, %s21, 1
          %p240 = scmp.lt.s32.totalorder %s22, 0
          %s241 = scalar_select %p240, %s22, 0
          %s242 = sadd.s32 %s241, %s239
          %s243 = smul.addr %s242, 4
          %s244 = scalar_lea.vmem %s3, %s243
        $region32: #{tpu_custom_call.1} parent=19 // pred_fallthru
          _
        // Predicated region
        $region33: #{tpu_custom_call.1} parent=19 // pred_check
          %p245 = pneg %p156
        $region34: #{tpu_custom_call.1} parent=19 // pred_check_branch
          %247 = sbr.rel (%p245) target = $region36
        $region35: #{tpu_custom_call.1} parent=19 // pred_region
          %p248 = scmp.lt.s32.totalorder %s21, 1
          %s249 = scalar_select %p248, %s21, 1
          %p250 = scmp.lt.s32.totalorder %s22, 0
          %s251 = scalar_select %p250, %s22, 0
          %s252 = sadd.s32 %s251, %s249
          %s253 = smul.addr %s252, 4
          %s254 = scalar_lea.vmem %s4, %s253
        $region36: #{tpu_custom_call.1} parent=19 // pred_fallthru
          _
      $region20: #{tpu_custom_call.1} parent=5 // pred_fallthru
        _
      %p255 = scmp.le.s32.totalorder 1, %s14
      %p256 = scmp.lt.s32.totalorder %s14, 3
      %p257 = pnand %p255, %p256
      %p258 = pneg %p257
      // Predicated region
      $region37: #{tpu_custom_call.1} parent=5 // pred_check
        _
      $region38: #{tpu_custom_call.1} parent=5 // pred_check_branch
        %260 = sbr.rel (%p257) target = $region40
      $region39: #{tpu_custom_call.1} parent=5 // pred_region
        %s261 = ssub.s32 %s14, 1
        %p262 = scmp.lt.s32.totalorder %s23, 1
        %s263 = scalar_select %p262, %s23, 1
        %p264 = scmp.lt.s32.totalorder %s24, 0
        %s265 = scalar_select %p264, %s24, 0
        %s266 = smul.addr %s265, 2
        %s267 = smul.addr %s263, 2
        %s268 = sadd.s32 %s266, %s267
        %s269 = smul.addr %s268, 4
        %s270 = scalar_lea.vmem %s0, %s269
        %p271 = pneg %p54
        %p272 = pneg %p51
        %p273 = scmp.lt.s32.totalorder %s23, 1
        %s274 = scalar_select %p273, %s23, 1
        %s275 = smul.addr %s274, 2
        %s276 = scalar_lea.vmem %s1, %s275
        %p277 = pneg %p80
        %p278 = pneg %p77
        %p279 = scmp.lt.s32.totalorder %s24, 0
        %s280 = scalar_select %p279, %s24, 0
        %s281 = smul.addr %s280, 4
        %s282 = scalar_lea.vmem %s2, %s281
        %p283 = pneg %p106
        %p284 = pneg %p103
        %p285 = scmp.lt.s32.totalorder %s23, 1
        %s286 = scalar_select %p285, %s23, 1
        %p287 = scmp.lt.s32.totalorder %s24, 0
        %s288 = scalar_select %p287, %s24, 0
        %s289 = sadd.s32 %s288, %s286
        %s290 = smul.addr %s289, 4
        %s291 = scalar_lea.vmem %s3, %s290
        %p292 = pneg %p134
        %p293 = pneg %p131
        %p294 = scmp.lt.s32.totalorder %s23, 1
        %s295 = scalar_select %p294, %s23, 1
        %p296 = scmp.lt.s32.totalorder %s24, 0
        %s297 = scalar_select %p296, %s24, 0
        %s298 = sadd.s32 %s297, %s295
        %s299 = smul.addr %s298, 4
        %s300 = scalar_lea.vmem %s4, %s299
        %p301 = pneg %p162
        %p302 = pneg %p159
        %p303 = pneg %p190
        %p304 = pneg %p187
        %s305 = sand.u32 %s177, 1
        %s306 = scalar_lea.sflag [#allocation3], %s305
        %s307 = sand.u32 %s177, 1
        %s308 = smul.addr %s307, 8
        %s309 = scalar_lea.vmem [#allocation2], %s308
        %p310 = scmp.lt.s32.totalorder %s23, 1
        %s311 = scalar_select %p310, %s23, 1
        %p312 = scmp.lt.s32.totalorder %s24, 0
        %s313 = scalar_select %p312, %s24, 0
        %s314 = smul.addr %s313, 2
        %s315 = smul.addr %s311, 2
        %s316 = sadd.s32 %s314, %s315
        %s317 = smul.addr %s316, 4
        %s318 = scalar_lea.vmem %s0, %s317
        %p319 = scmp.lt.s32.totalorder %s23, 1
        %s320 = scalar_select %p319, %s23, 1
        %s321 = smul.addr %s320, 2
        %s322 = scalar_lea.vmem %s1, %s321
        %p323 = scmp.lt.s32.totalorder %s24, 0
        %s324 = scalar_select %p323, %s24, 0
        %s325 = smul.addr %s324, 4
        %s326 = scalar_lea.vmem %s2, %s325
        %p327 = scmp.lt.s32.totalorder %s23, 1
        %s328 = scalar_select %p327, %s23, 1
        %p329 = scmp.lt.s32.totalorder %s24, 0
        %s330 = scalar_select %p329, %s24, 0
        %s331 = sadd.s32 %s330, %s328
        %s332 = smul.addr %s331, 4
        %s333 = scalar_lea.vmem %s3, %s332
        %p334 = scmp.lt.s32.totalorder %s23, 1
        %s335 = scalar_select %p334, %s23, 1
        %p336 = scmp.lt.s32.totalorder %s24, 0
        %s337 = scalar_select %p336, %s24, 0
        %s338 = sadd.s32 %s337, %s335
        %s339 = smul.addr %s338, 4
        %s340 = scalar_lea.vmem %s4, %s339
        %v341 = vld [vmem:[%s318] sm:$0xff]
        %v342 = vld [vmem:[%s322] sm:$0x3]
        %v343 = vld [vmem:[%s326] sm:$0xf]
        %345 = vset.pattern.permute.xlu0 0
        %346 = vperm.xlu0 %345, %v343
        %v347 = vpop.permute.xlu0 %346
        %v350 = vlaneseq
        %v351 = vshrl.u32 %v350, 7
        %v352 = vsub.s32 0, %v351
        %v353 = vrot.slane %v342, %v352
        %v354 = vlaneseq
        %v355 = vshrl.u32 %v354, 7
        %v356 = vsub.s32 1, %v355
        %v357 = vrot.slane %v342, %v356
        %v360 = vmul.f32 %v347, %v353
        %v361 = vmul.f32 %v347, %v357
        %v364 = vcombine.low %v360, %v361
        %v366 = vadd.f32 %v341, %v364
        %v367 = vmul.f32 %v366, 0.2
        %v368 = vmax.f32 %v366, %v367
        %v370 = vcombine.high %v368, %v368
        %vm372 = vcmask 1043456
        %v373 = vsel %vm372, %v368, 0.0
        %v374 = vsel %vm372, %v370, 0.0
        %v375 = vadd.f32 %v373, %v374
        %376 = vadd.xlane.f32.xlu0 %v375
        %v377 = vpop.xlane.xlu0 %376
        %v378 = vrcp.pop 256.0
        %v379 = vmul.f32 %v377, %v378
        %v382 = vunpack.c.l.s4 839922192
        %v383 = vunpack.c.0.s8 %v382
        %v384 = vlaneseq
        %v385 = vshrl.u32 %v384, 7
        %v386 = vsub.s32 %v383, %v385
        %v387 = vrot.slane %v379, %v386
        %v389 = vsub.f32 %v368, %v387
        %v390 = vmul.f32 %v389, %v389
        %v392 = vcombine.high %v390, %v390
        %v394 = vsel %vm372, %v390, 0.0
        %v395 = vsel %vm372, %v392, 0.0
        %v396 = vadd.f32 %v394, %v395
        %397 = vadd.xlane.f32.xlu0 %v396
        %v398 = vpop.xlane.xlu0 %397
        %v399 = vmul.f32 %v398, %v378
        %v400 = vadd.f32 %v399, 1e-05
        %v401 = vrsqrt.pop %v400
        %v402 = vld [vmem:[%s333] sm:$0xf]
        %v403 = vmul.f32 %v401, %v402
        %v404 = vld [vmem:[%s340] sm:$0xf]
        %406 = vset.pattern.permute.xlu0 0
        %407 = vperm.xlu0 %406, %v403
        %v408 = vpop.permute.xlu0 %407
        %v410 = vunpack.c.l.s4 839922192
        %v411 = vunpack.c.0.s8 %v410
        %v412 = vlaneseq
        %v413 = vshrl.u32 %v412, 7
        %v414 = vsub.s32 %v411, %v413
        %v415 = vrot.slane %v408, %v414
        %v417 = vmul.f32 %v389, %v415
        %419 = vset.pattern.permute.xlu0 0
        %420 = vperm.xlu0 %419, %v404
        %v421 = vpop.permute.xlu0 %420
        %v423 = vunpack.c.l.s4 839922192
        %v424 = vunpack.c.0.s8 %v423
        %v425 = vlaneseq
        %v426 = vshrl.u32 %v425, 7
        %v427 = vsub.s32 %v424, %v426
        %v428 = vrot.slane %v421, %v427
        %v430 = vadd.f32 %v417, %v428
        %431 = vst [vmem:[%s309] sm:$0xff] %v430
        %s432 = sand.u32 %s177, 1
        %s433 = scalar_lea.sflag [#allocation3], %s432
        %s434 = sand.u32 %s177, 1
        %s435 = smul.addr %s434, 8
        %s436 = scalar_lea.vmem [#allocation2], %s435
        // Predicated region
        $region41: #{tpu_custom_call.1} parent=39 // pred_check
          %p437 = pneg %p187
        $region42: #{tpu_custom_call.1} parent=39 // pred_check_branch
          %439 = sbr.rel (%p437) target = $region44
        $region43: #{tpu_custom_call.1} parent=39 // pred_region
          %s441 = ssub.s32 128, 128
          %442 = vsyncadd %s433, %s441
          %s443 = smul.addr %s24, 2
          %s444 = smul.addr %s23, 2
          %s445 = sadd.s32 %s443, %s444
          %s446 = smul.addr %s445, 64
          %s447 = scalar_lea.hbm %s5, %s446
          %s449 = sshll.u32 %s436, 4
          %s450 = int_to_ptr.vmem [resolvable:$true] %s449
          %452 = dma.vmem_to_hbm [thread:$0]  %s450, 128, %s447, %s433
        $region44: #{tpu_custom_call.1} parent=39 // pred_fallthru
          _
      $region40: #{tpu_custom_call.1} parent=5 // pred_fallthru
        _
      %p453 = scmp.le.s32.totalorder 2, %s14
      // Predicated region
      $region45: #{tpu_custom_call.1} parent=5 // pred_check
        %p454 = pneg %p453
      $region46: #{tpu_custom_call.1} parent=5 // pred_check_branch
        %456 = sbr.rel (%p454) target = $region48
      $region47: #{tpu_custom_call.1} parent=5 // pred_region
        %s457 = ssub.s32 %s14, 2
        // Predicated region
        $region49: #{tpu_custom_call.1} parent=47 // pred_check
          %p458 = pneg %p193
        $region50: #{tpu_custom_call.1} parent=47 // pred_check_branch
          %460 = sbr.rel (%p458) target = $region52
        $region51: #{tpu_custom_call.1} parent=47 // pred_region
          %s461 = sand.u32 %s178, 1
          %s462 = scalar_lea.sflag [#allocation3], %s461
          %s463 = sand.u32 %s178, 1
          %s464 = smul.addr %s463, 8
          %s465 = scalar_lea.vmem [#allocation2], %s464
          %466 = dma.done %s462, 128
        $region52: #{tpu_custom_call.1} parent=47 // pred_fallthru
          _
      $region48: #{tpu_custom_call.1} parent=5 // pred_fallthru
        _
    $region6: #{tpu_custom_call.1} parent=1 // loop_footer
      %s18 = sadd.s32 1, %s14
    $region7: #{tpu_custom_call.1} parent=1 // loop_footer_branch
      %13 = sbr.rel target = $region3
    $region8: #{tpu_custom_call.1} parent=1 // loop_exit
      _
    %467 = vsyncpa [#allocation3], 1
    %s468 = scalar_lea.sflag [#allocation3], 1
    %469 = vsyncpa %s468, 1

</llo_original>
